<compile_context>
chip_gen: v6e
topology: v6e:2x2x1
jax: 0.10.0
libtpu: 0.0.40
codegen_flags: <defaults>
</compile_context>

<pallas_src>
import functools

import jax
import jax.numpy as jnp
from jax import lax
from jax.experimental import pallas as pl
from jax.experimental.pallas import tpu as pltpu


def _round_up(x, m):
    return ((x + m - 1) // m) * m


def _device_kind():
    try:
        return jax.devices()[0].device_kind.lower()
    except Exception:
        return ""


def _tpu_vmem_capacity_bytes():
    try:
        return int(pltpu.get_tpu_info().vmem_capacity_bytes)
    except Exception:
        pass
    kind = _device_kind()
    return (64 << 20) if "v7" in kind else (128 << 20)


def _resolve_label_dtype(label_dtype, B, L):
    if label_dtype is not None and label_dtype != "auto":
        return jnp.dtype(label_dtype)
    kind = _device_kind()
    # v5e/v6e MXUs have a native int8 path (up to 2x bf16 rate); int8 also
    # halves VMEM residency and HBM DMA.  Exact for 0/1 multi-hot labels.
    # v7x has no int MXU path, so stay on bf16 there.
    if (("v5" in kind) or ("v6" in kind)) and B >= 256 and L >= 128:
        return jnp.dtype(jnp.int8)
    return jnp.dtype(jnp.bfloat16)


def _contrastive_loss_kernel(lhs_ref, rhs_ref, out_ref, m_ref, l_ref, *,
                             inv_tau, valid_b, block_m, block_n,
                             acc_dtype, col_padded, row_padded, exp_in_bf16):
    """One (row-tile, column-tile) step of the contrastive cross-entropy.

    lhs_ref : (TM, L)   label rows owned by this row-program (resident over j)
    rhs_ref : (L, TN)   streamed column tile of the (transposed) label matrix
    out_ref : (1, 128)  lane-dense partial-sum slot for this row tile
    m_ref   : (TM, 1)   running max of the unscaled logits
    l_ref   : (TM, 1)   running sum of exp((s - m) / tau)
    """
    j = pl.program_id(1)
    nj = pl.num_programs(1)

    @pl.when(j == 0)
    def _():
        m_ref[...] = jnp.full(m_ref.shape, -jnp.inf, dtype=m_ref.dtype)
        l_ref[...] = jnp.zeros(l_ref.shape, dtype=l_ref.dtype)

    lhs = lhs_ref[...]                               # (TM, L)
    rhs = rhs_ref[...]                               # (L, TN)

    # Canonical (M,K)x(K,N) contraction on the MXU; f32 (or i32) accumulation.
    s = lax.dot_general(
        lhs, rhs,
        dimension_numbers=(((1,), (0,)), ((), ())),
        preferred_element_type=acc_dtype,
    ).astype(jnp.float32)                            # (TM, TN)

    # Online logsumexp over column tiles; 1/tau (tau > 0) folded into the
    # exponent so the (TM, TN) tile is never separately scaled.
    m_prev = m_ref[...]                              # (TM, 1)
    m_cur = jnp.max(s, axis=-1, keepdims=True)       # (TM, 1)
    m_new = jnp.maximum(m_prev, m_cur)
    alpha = jnp.exp((m_prev - m_new) * inv_tau)      # exp(-inf) = 0 on tile 0

    z = (s - m_new) * inv_tau
    if exp_in_bf16:
        # Optional: EUP bf16 exp (v6e/v7x) roughly doubles exp throughput.
        p = jnp.exp(z.astype(jnp.bfloat16)).astype(jnp.float32)
    else:
        p = jnp.exp(z)
    p_sum = jnp.sum(p, axis=-1, keepdims=True)       # (TM, 1)

    if col_padded:
        # Padded RHS columns are all-zero -> logit exactly 0.  Remove their
        # softmax mass with a (TM, 1) analytic correction instead of a
        # whole-tile iota/where mask.
        n_pad = jnp.clip((j + 1) * block_n - valid_b, 0, block_n).astype(jnp.float32)
        p_sum = p_sum - n_pad * jnp.exp(-m_new * inv_tau)

    l_ref[...] = alpha * l_ref[...] + p_sum
    m_ref[...] = m_new

    @pl.when(j == nj - 1)
    def _():
        # Diagonal analytically from the SAME cast operand the MXU saw:
        # S[i, i] / tau = rowsum(l_i * l_i) * inv_tau  -> lse/diag consistent.
        lhs_f32 = lhs.astype(jnp.float32)
        diag = jnp.sum(lhs_f32 * lhs_f32, axis=-1, keepdims=True) * inv_tau
        lse = m_ref[...] * inv_tau + jnp.log(l_ref[...])
        per_row = lse - diag                          # (TM, 1)
        if row_padded:
            row = (pl.program_id(0) * block_m
                   + lax.broadcasted_iota(jnp.int32, per_row.shape, 0))
            per_row = jnp.where(row < valid_b, per_row, 0.0)
        out_ref[...] = jnp.full(out_ref.shape, jnp.sum(per_row),
                                dtype=out_ref.dtype)


def contrastive_loss(text_embeddings, text_labels, tau=1.0, *,
                     label_dtype="auto", block_m=None, block_n=None,
                     exp_in_bf16=False):
    """Pallas equivalent of ContrastiveLoss.forward.

    text_embeddings : (B, H)  -- only its length is used (targets = arange(B))
    text_labels     : (B, L)
    label_dtype     : "auto" (bf16, or int8 on v5e/v6e for large shapes; exact
                      for the 0/1 multi-hot labels this loss is used with),
                      or an explicit dtype ("float32" for general real labels).
    Returns a scalar float32 loss.
    """
    if not tau > 0:
        raise ValueError("ContrastiveLoss requires tau > 0 (got %r)" % (tau,))
    B, L = text_labels.shape
    assert text_embeddings.shape[0] == B, "targets come from len(text_embeddings)"

    in_dtype = _resolve_label_dtype(label_dtype, B, L)
    acc_dtype = jnp.int32 if jnp.issubdtype(in_dtype, jnp.integer) else jnp.float32
    isz = in_dtype.itemsize

    # ---- per-generation tile / VMEM sizing -------------------------------
    vmem_cap = _tpu_vmem_capacity_bytes()
    budget = int(0.6 * vmem_cap)                      # headroom for compiler temps

    B8 = _round_up(B, 8)
    TM = min(512, B8) if block_m is None else min(block_m, B8)
    TM = max(8, _round_up(TM, 8))

    def footprint(tm, tn):
        lhs_b = 2 * tm * L * isz                      # row slab (double-buffered)
        rhs_b = (1 if tn >= B8 else 2) * L * tn * isz # resident -> 1 buffer
        tmp_b = 3 * tm * tn * 4                       # s, p + slack (f32)
        scr_b = 2 * tm * 128 * 4                      # m/l scratch (lane-padded)
        return lhs_b + rhs_b + tmp_b + scr_b + 2 * 128 * 4

    if block_n is not None:
        tn_cands = [block_n]
    else:
        tn_cands = []
        if B8 <= 4096:
            tn_cands.append(B8)                       # single pass over columns
        tn_cands += [tn for tn in (2048, 1024, 512, 256, 128) if tn < B8]
        if not tn_cands:
            tn_cands = [B8]

    TN = None
    for tn in tn_cands:
        if footprint(TM, tn) <= budget:
            TN = tn
            break
    if TN is None:                                    # very wide L: shrink rows
        TN = tn_cands[-1]
        while TM > 8 and footprint(TM, TN) > budget:
            TM = max(8, _round_up(TM // 2, 8))
    # TODO(synk): also tile the label dim L for extremely wide label spaces
    # (a (TM, L) row slab is assumed to fit VMEM here).

    B_pad_m = _round_up(B, TM)
    B_pad_n = _round_up(B, TN)
    n_i = B_pad_m // TM
    n_j = B_pad_n // TN

    vmem_limit = int(min(int(0.9 * vmem_cap),
                         max(footprint(TM, TN) + (8 << 20), 32 << 20)))

    # ---- operand prep -----------------------------------------------------
    labels = text_labels.astype(in_dtype)
    lhs = labels
    if B_pad_m != B:
        lhs = jnp.pad(lhs, ((0, B_pad_m - B), (0, 0)))
    rhs = labels.T                                    # one-time XLA transpose
    if B_pad_n != B:
        rhs = jnp.pad(rhs, ((0, 0), (0, B_pad_n - B)))

    def _spec(shape, index_map, single_buffer):
        # Single-buffer blocks whose index never changes across the grid
        # (default double-buffering of a resident block is pure VMEM waste).
        if single_buffer and hasattr(pl, "Buffered"):
            try:
                return pl.BlockSpec(shape, index_map, pipeline_mode=pl.Buffered(1))
            except TypeError:
                pass
        return pl.BlockSpec(shape, index_map)

    multi_step = (n_i * n_j) > 1
    lhs_spec = _spec((TM, L), lambda i, j: (i, 0),
                     single_buffer=multi_step and n_i == 1)
    rhs_spec = _spec((L, TN), lambda i, j: (0, j),
                     single_buffer=multi_step and n_j == 1)

    kernel = functools.partial(
        _contrastive_loss_kernel,
        inv_tau=float(1.0 / tau), valid_b=B, block_m=TM, block_n=TN,
        acc_dtype=acc_dtype, col_padded=(B_pad_n != B),
        row_padded=(B_pad_m != B), exp_in_bf16=bool(exp_in_bf16),
    )

    partials = pl.pallas_call(
        kernel,
        out_shape=jax.ShapeDtypeStruct((n_i, 128), jnp.float32),
        grid=(n_i, n_j),
        in_specs=[lhs_spec, rhs_spec],
        # Lane-dense (1, 128) partial-sum slot per row tile.  With n_i not a
        # multiple of 8 this emits masked sublane stores; kept knowingly -- the
        # writeback is a handful of bytes per row tile.
        out_specs=pl.BlockSpec((1, 128), lambda i, j: (i, 0)),
        scratch_shapes=[pltpu.VMEM((TM, 1), jnp.float32),    # running max m
                        pltpu.VMEM((TM, 1), jnp.float32)],   # running sum l
        compiler_params=pltpu.CompilerParams(
            dimension_semantics=("parallel", "arbitrary"),
            vmem_limit_bytes=vmem_limit,
        ),
    )(lhs, rhs)

    return jnp.sum(partials[:, 0]) / B


def _reference_loss(text_embeddings, text_labels, tau=1.0):
    # Plain-JAX reference (mirrors torch.nn.CrossEntropyLoss with diag targets).
    S = (text_labels @ text_labels.T) / tau
    logp = jax.nn.log_softmax(S, axis=-1)
    B = text_embeddings.shape[0]
    return -jnp.mean(logp[jnp.arange(B), jnp.arange(B)])


if __name__ == "__main__":
    key = jax.random.PRNGKey(0)
    k_emb, k_lab = jax.random.split(key)

    B, H, L = 8, 32, 16  # small synthetic shapes
    text_embeddings = jax.random.normal(k_emb, (B, H), dtype=jnp.float32)
    # labels: multi-hot float labels (the PyTorch code just matmuls them)
    text_labels = (jax.random.uniform(k_lab, (B, L)) > 0.5).astype(jnp.float32)

    loss = contrastive_loss(text_embeddings, text_labels, tau=1.0)
    loss = jax.block_until_ready(loss)

    ref = _reference_loss(text_embeddings, text_labels, tau=1.0)
    assert jnp.allclose(loss, ref, rtol=1e-5, atol=1e-5), (loss, ref)

    print("KERNEL_OK")
</pallas_src>

<mosaic_0001>
module attributes {stable_mosaic.version = 11 : i64} {
  func.func @_contrastive_loss_kernel(%arg0: i32, %arg1: i32, %arg2: memref<8x16xbf16, #tpu.memory_space<vmem>>, %arg3: memref<16x8xbf16, #tpu.memory_space<vmem>>, %arg4: memref<1x128xf32, #tpu.memory_space<vmem>>, %arg5: memref<8x1xf32, #tpu.memory_space<vmem>>, %arg6: memref<8x1xf32, #tpu.memory_space<vmem>>) attributes {dimension_semantics = [#tpu.dimension_semantics<parallel>, #tpu.dimension_semantics<arbitrary>], iteration_bounds = array<i64: 1, 1>, scalar_prefetch = 0 : i64, scratch_operands = 2 : i64, tpu.core_type = #tpu.core_type<tc>, window_params = [{transform_indices = @transform_0, window_bounds = array<i64: 8, 16>}, {transform_indices = @transform_1, window_bounds = array<i64: 16, 8>}, {transform_indices = @transform_2, window_bounds = array<i64: 1, 128>}]} {
    %c0_i32 = arith.constant 0 : i32
    %0 = arith.cmpi eq, %arg1, %c0_i32 : i32
    %1 = arith.extui %0 : i1 to i32
    %c0_i32_0 = arith.constant 0 : i32
    %2 = arith.cmpi ne, %1, %c0_i32_0 : i32
    scf.if %2 {
      %cst_18 = arith.constant 0xFF800000 : f32
      %29 = vector.broadcast %cst_18 : f32 to vector<8x1xf32>
      %c0_19 = arith.constant 0 : index
      %c0_20 = arith.constant 0 : index
      %30 = vector.load %arg5[%c0_19, %c0_20] : memref<8x1xf32, #tpu.memory_space<vmem>>, vector<8x1xf32>
      tpu.vector_store %arg5[%c0_19, %c0_20], %29 {strides = array<i32>} : memref<8x1xf32, #tpu.memory_space<vmem>>, vector<8x1xf32>,
      %cst_21 = arith.constant 0.000000e+00 : f32
      %31 = vector.broadcast %cst_21 : f32 to vector<8x1xf32>
      %c0_22 = arith.constant 0 : index
      %c0_23 = arith.constant 0 : index
      %32 = vector.load %arg6[%c0_22, %c0_23] : memref<8x1xf32, #tpu.memory_space<vmem>>, vector<8x1xf32>
      tpu.vector_store %arg6[%c0_22, %c0_23], %31 {strides = array<i32>} : memref<8x1xf32, #tpu.memory_space<vmem>>, vector<8x1xf32>,
    } else {
    }
    %c0 = arith.constant 0 : index
    %c0_1 = arith.constant 0 : index
    %3 = vector.load %arg2[%c0, %c0_1] : memref<8x16xbf16, #tpu.memory_space<vmem>>, vector<8x16xbf16>
    %c0_2 = arith.constant 0 : index
    %c0_3 = arith.constant 0 : index
    %4 = vector.load %arg3[%c0_2, %c0_3] : memref<16x8xbf16, #tpu.memory_space<vmem>>, vector<16x8xbf16>
    %cst = arith.constant dense<0.000000e+00> : vector<8x8xf32>
    %5 = tpu.matmul %3, %4, %cst {dimension_numbers = #tpu.dot_dimension_numbers<[1], [0], [0], [1], [0, 0, 1, 1], [], []>} : vector<8x16xbf16>, vector<16x8xbf16>, vector<8x8xf32> -> vector<8x8xf32>
    %c0_4 = arith.constant 0 : index
    %c0_5 = arith.constant 0 : index
    %6 = vector.load %arg5[%c0_4, %c0_5] : memref<8x1xf32, #tpu.memory_space<vmem>>, vector<8x1xf32>
    %cst_6 = arith.constant dense<0xFF800000> : vector<8xf32>
    %7 = vector.multi_reduction <maximumf>, %5, %cst_6 [1] : vector<8x8xf32> to vector<8xf32>
    %8 = vector.shape_cast %7 : vector<8xf32> to vector<8x1xf32>
    %9 = arith.maximumf %6, %8 : vector<8x1xf32>
    %10 = arith.subf %6, %9 : vector<8x1xf32>
    %cst_7 = arith.constant 1.000000e+00 : f32
    %11 = vector.broadcast %cst_7 : f32 to vector<8x1xf32>
    %12 = arith.mulf %10, %11 : vector<8x1xf32>
    %13 = math.exp %12 : vector<8x1xf32>
    %14 = vector.broadcast %9 : vector<8x1xf32> to vector<8x8xf32>
    %15 = arith.subf %5, %14 : vector<8x8xf32>
    %cst_8 = arith.constant 1.000000e+00 : f32
    %16 = vector.broadcast %cst_8 : f32 to vector<8x8xf32>
    %17 = arith.mulf %15, %16 : vector<8x8xf32>
    %18 = math.exp %17 : vector<8x8xf32>
    %cst_9 = arith.constant dense<0.000000e+00> : vector<8xf32>
    %19 = vector.multi_reduction <add>, %18, %cst_9 [1] : vector<8x8xf32> to vector<8xf32>
    %20 = vector.shape_cast %19 : vector<8xf32> to vector<8x1xf32>
    %c0_10 = arith.constant 0 : index
    %c0_11 = arith.constant 0 : index
    %21 = vector.load %arg6[%c0_10, %c0_11] : memref<8x1xf32, #tpu.memory_space<vmem>>, vector<8x1xf32>
    %22 = arith.mulf %13, %21 : vector<8x1xf32>
    %23 = arith.addf %22, %20 : vector<8x1xf32>
    %c0_12 = arith.constant 0 : index
    %c0_13 = arith.constant 0 : index
    %24 = vector.load %arg6[%c0_12, %c0_13] : memref<8x1xf32, #tpu.memory_space<vmem>>, vector<8x1xf32>
    tpu.vector_store %arg6[%c0_12, %c0_13], %23 {strides = array<i32>} : memref<8x1xf32, #tpu.memory_space<vmem>>, vector<8x1xf32>,
    %c0_14 = arith.constant 0 : index
    %c0_15 = arith.constant 0 : index
    %25 = vector.load %arg5[%c0_14, %c0_15] : memref<8x1xf32, #tpu.memory_space<vmem>>, vector<8x1xf32>
    tpu.vector_store %arg5[%c0_14, %c0_15], %9 {strides = array<i32>} : memref<8x1xf32, #tpu.memory_space<vmem>>, vector<8x1xf32>,
    %c0_i32_16 = arith.constant 0 : i32
    %26 = arith.cmpi eq, %arg1, %c0_i32_16 : i32
    %27 = arith.extui %26 : i1 to i32
    %c0_i32_17 = arith.constant 0 : i32
    %28 = arith.cmpi ne, %27, %c0_i32_17 : i32
    scf.if %28 {
      %29 = arith.extf %3 : vector<8x16xbf16> to vector<8x16xf32>
      %30 = arith.mulf %29, %29 : vector<8x16xf32>
      %cst_18 = arith.constant dense<0.000000e+00> : vector<8xf32>
      %31 = vector.multi_reduction <add>, %30, %cst_18 [1] : vector<8x16xf32> to vector<8xf32>
      %32 = vector.shape_cast %31 : vector<8xf32> to vector<8x1xf32>
      %cst_19 = arith.constant 1.000000e+00 : f32
      %33 = vector.broadcast %cst_19 : f32 to vector<8x1xf32>
      %34 = arith.mulf %32, %33 : vector<8x1xf32>
      %c0_20 = arith.constant 0 : index
      %c0_21 = arith.constant 0 : index
      %35 = vector.load %arg5[%c0_20, %c0_21] : memref<8x1xf32, #tpu.memory_space<vmem>>, vector<8x1xf32>
      %cst_22 = arith.constant 1.000000e+00 : f32
      %36 = vector.broadcast %cst_22 : f32 to vector<8x1xf32>
      %37 = arith.mulf %35, %36 : vector<8x1xf32>
      %c0_23 = arith.constant 0 : index
      %c0_24 = arith.constant 0 : index
      %38 = vector.load %arg6[%c0_23, %c0_24] : memref<8x1xf32, #tpu.memory_space<vmem>>, vector<8x1xf32>
      %39 = math.log %38 : vector<8x1xf32>
      %40 = arith.addf %37, %39 : vector<8x1xf32>
      %41 = arith.subf %40, %34 : vector<8x1xf32>
      %42 = vector.shape_cast %41 : vector<8x1xf32> to vector<1x8x1xf32>
      %cst_25 = arith.constant dense<0.000000e+00> : vector<1xf32>
      %43 = vector.multi_reduction <add>, %42, %cst_25 [1, 2] : vector<1x8x1xf32> to vector<1xf32>
      %44 = vector.shape_cast %43 : vector<1xf32> to vector<1x1x1xf32>
      %45 = vector.extract %44[0, 0, 0] : f32 from vector<1x1x1xf32>
      %46 = vector.broadcast %45 : f32 to vector<1x128xf32>
      %c0_26 = arith.constant 0 : index
      %c0_27 = arith.constant 0 : index
      %47 = vector.load %arg4[%c0_26, %c0_27] : memref<1x128xf32, #tpu.memory_space<vmem>>, vector<1x128xf32>
      tpu.vector_store %arg4[%c0_26, %c0_27], %46 {strides = array<i32>} : memref<1x128xf32, #tpu.memory_space<vmem>>, vector<1x128xf32>,
    } else {
    }
    return
  }
  func.func @transform_0(%arg0: i32, %arg1: i32) -> (i32, i32) {
    %c0_i32 = arith.constant 0 : i32
    %c0_i32_0 = arith.constant 0 : i32
    return %arg0, %c0_i32 : i32, i32
  }
  func.func @transform_1(%arg0: i32, %arg1: i32) -> (i32, i32) {
    %c0_i32 = arith.constant 0 : i32
    %c0_i32_0 = arith.constant 0 : i32
    return %c0_i32, %arg1 : i32, i32
  }
  func.func @transform_2(%arg0: i32, %arg1: i32) -> (i32, i32) {
    %c0_i32 = arith.constant 0 : i32
    %c0_i32_0 = arith.constant 0 : i32
    return %arg0, %c0_i32 : i32, i32
  }
}

</mosaic_0001>

<llo_original>
// kernel: tpu_custom_call.1
$region0: #{tpu_custom_call.1}
  #allocation0 [shape = 'u32[]', space=smem, size = 0x4, offset = 0x4, fixed_abs, tag = 'smem constant byte address 0x4 - core index']
  #allocation1 [shape = 'u32[144,128]{1,0:T(1,128)}', space=vmem, size = 0x12000, scoped, tag = 'internal scratch']
  #allocation2 [shape = 'f32[8,1]{1,0:T(8,128)}', space=vmem, size = 0x1000, scoped, tag = 'scratch operand']
  #allocation3 [shape = 'f32[8,1]{1,0:T(8,128)}', space=vmem, size = 0x1000, scoped, tag = 'scratch operand']
  %s0 = inlined_call_operand.vmem [shape: bf16[8,16], index: 0, kind: input, shape index: {}]
  %s1 = inlined_call_operand.vmem [shape: bf16[16,8], index: 1, kind: input, shape index: {}]
  %s2 = inlined_call_operand.hbm [shape: f32[1,128], index: 2, kind: output, shape index: {}]
  %s3 = sld [smem:[#allocation0]]
  $region26: #{tpu_custom_call.1} parent=0
    _
  %s5 = ssub.s32 1, %s3
  %s6 = scalar_select 0, %s5, %s3
  $region1: #{tpu_custom_call.1} parent=0
    #allocation4 [shape = 'u8[512]{0}', space=vmem, size = 0x400, scoped, tag = 'output window, operand 0, single buffered']
    #allocation5 [shape = 's32[1]{0}', space=sflag, size = 0x4, scoped, tag = 'scoped memory for tpu_custom_call.1']
    %7 = vsyncpa [#allocation5], 0
    // Predicated region
    $region2: #{tpu_custom_call.1} parent=1 // pred_check
      _
    $region3: #{tpu_custom_call.1} parent=1 // pred_check_branch
      %9 = sbr.rel (0) target = $region5
    $region4: #{tpu_custom_call.1} parent=1 // pred_region
      _
    $region5: #{tpu_custom_call.1} parent=1 // pred_fallthru
      _
    // Predicated region
    $region6: #{tpu_custom_call.1} parent=1 // pred_check
      _
    $region7: #{tpu_custom_call.1} parent=1 // pred_check_branch
      %11 = sbr.rel (0) target = $region9
    $region8: #{tpu_custom_call.1} parent=1 // pred_region
      _
    $region9: #{tpu_custom_call.1} parent=1 // pred_fallthru
      _
    %p13 = scmp.eq.s32.totalorder 0, 0
    // Predicated region
    $region10: #{tpu_custom_call.1} parent=1 // pred_check
      %p14 = pneg %p13
    $region11: #{tpu_custom_call.1} parent=1 // pred_check_branch
      %16 = sbr.rel (%p14) target = $region13
    $region12: #{tpu_custom_call.1} parent=1 // pred_region
      %vm17 = vcmask 7168
      %18 = vst.msk [vmem:[#allocation2] sm:$0xff] %vm17, -inf
      %19 = vst.msk [vmem:[#allocation3] sm:$0xff] %vm17, 0.0
    $region13: #{tpu_custom_call.1} parent=1 // pred_fallthru
      _
    %v20 = vld [vmem:[%s0] sm:$0xf]
    %v21 = vld [vmem:[%s1] sm:$0xf]
    %v22 = vld [vmem:[%s1 + $0x4] sm:$0xf]
    %v25 = vunpack.c.l.b16 %v21
    %v26 = vunpack.c.l.b16 %v22
    %v27 = vpack.c.b16 %v26, %v25
    %vm29 = vcmask 130048
    %v31 = vsel %vm29, %v20, 0
    %33 = vmatprep.subr.bf16.mxu0 0
    %34 = vmatpush1.bf16.msra.mxu0 0
    %35 = vmatprep.subr.bf16.mxu0 0
    %36 = vmatpush1.bf16.msra.mxu0 0
    %37 = vmatprep.subr.bf16.mxu0 0
    %38 = vmatpush1.bf16.msra.mxu0 0
    %39 = vmatprep.subr.bf16.mxu0 0
    %40 = vmatpush1.bf16.msra.mxu0 0
    %41 = vmatprep.subr.bf16.mxu0 0
    %42 = vmatpush1.bf16.msra.mxu0 0
    %43 = vmatprep.subr.bf16.mxu0 0
    %44 = vmatpush1.bf16.msra.mxu0 0
    %45 = vmatprep.subr.bf16.mxu0 0
    %46 = vmatpush1.bf16.msra.mxu0 0
    %47 = vmatprep.subr.bf16.mxu0 0
    %48 = vmatpush1.bf16.msra.mxu0 %v27
    %49 = vmatprep.subr.bf16.mxu0 0
    %50 = vmatpush2.bf16.msra.mxu0 0
    %51 = vmatprep.subr.bf16.mxu0 0
    %52 = vmatpush2.bf16.msra.mxu0 0
    %53 = vmatprep.subr.bf16.mxu0 0
    %54 = vmatpush2.bf16.msra.mxu0 0
    %55 = vmatprep.subr.bf16.mxu0 0
    %56 = vmatpush2.bf16.msra.mxu0 0
    %57 = vmatprep.subr.bf16.mxu0 0
    %58 = vmatpush2.bf16.msra.mxu0 0
    %59 = vmatprep.subr.bf16.mxu0 0
    %60 = vmatpush2.bf16.msra.mxu0 0
    %61 = vmatprep.subr.bf16.mxu0 0
    %62 = vmatpush2.bf16.msra.mxu0 0
    %63 = vmatprep.subr.bf16.mxu0 0
    %64 = vmatpush2.bf16.msra.mxu0 0
    %65 = vmatprep.mubr.bf16.mxu0 0
    %66 = vmatmul.mubr.bf16.gmra.mxu0 %v31
    %v67 = vpop.f32.mrf.mxu0
    %v68 = vadd.f32 0.0, %v67
    %v69 = vpop.f32.mrf.mxu0
    %v70 = vpop.f32.mrf.mxu0
    %v71 = vpop.f32.mrf.mxu0
    %72 = vdwg.mxu0
    %v73 = vld [vmem:[#allocation2] sm:$0xff]
    %vm74 = vcmask 64512
    %v75 = vsel %vm74, %v68, -inf
    %76 = vmax.xlane.f32.xlu0 %v75
    %v77 = vpop.xlane.xlu0 %76
    %v78 = vmax.f32 %v73, %v77
    %v79 = vsub.f32 %v73, %v78
    %v80 = vmul.f32 %v79, 1.442695
    %v81 = vpow.pop %v80
    %83 = vset.pattern.permute.xlu0 0
    %84 = vperm.xlu0 %83, %v78
    %v85 = vpop.permute.xlu0 %84
    %v87 = vsub.f32 %v68, %v85
    %v88 = vmul.f32 %v87, 1.442695
    %v89 = vpow.pop %v88
    %v90 = vsel %vm74, %v89, 0.0
    %91 = vadd.xlane.f32.xlu0 %v90
    %v92 = vpop.xlane.xlu0 %91
    %v93 = vld [vmem:[#allocation3] sm:$0xff]
    %v94 = vmul.f32 %v81, %v93
    %v95 = vadd.f32 %v94, %v92
    %vm96 = vcmask 7168
    %97 = vst.msk [vmem:[#allocation3] sm:$0xff] %vm96, %v95
    %98 = vst.msk [vmem:[#allocation2] sm:$0xff] %vm96, %v78
    // Predicated region
    $region14: #{tpu_custom_call.1} parent=1 // pred_check
      %p99 = pneg %p13
    $region15: #{tpu_custom_call.1} parent=1 // pred_check_branch
      %101 = sbr.rel (%p99) target = $region17
    $region16: #{tpu_custom_call.1} parent=1 // pred_region
      %v102 = vunpack.c.l.bf16 %v20
      %v103 = vmul.f32 %v102, %v102
      %v104 = vsel %vm29, %v103, 0.0
      %105 = vadd.xlane.f32.xlu0 %v104
      %v106 = vpop.xlane.xlu0 %105
      %v107 = vld [vmem:[#allocation2] sm:$0xff]
      %v108 = vld [vmem:[#allocation3] sm:$0xff]
      %v109 = vlog2.pop %v108
      %v110 = vmul.f32 %v109, 0.6931472
      %v111 = vadd.f32 %v107, %v110
      %v112 = vsub.f32 %v111, %v106
      %v113 = vsel %vm96, %v112, 0.0
      %114 = vadd.xlane.f32.xlu0 %v113
      %v115 = vpop.xlane.xlu0 %114
      %v116 = vrot.slane %v115, 4
      %v117 = vadd.f32 %v115, %v116
      %v118 = vrot.slane %v117, 2
      %v119 = vadd.f32 %v117, %v118
      %v120 = vrot.slane %v119, 1
      %v121 = vadd.f32 %v119, %v120
      %s122 = vtos %v121
      %v123 = vstv %s122
      %124 = vst [vmem:[#allocation4] sm:$0x1] %v123
    $region17: #{tpu_custom_call.1} parent=1 // pred_fallthru
      _
    // Predicated region
    $region18: #{tpu_custom_call.1} parent=1 // pred_check
      _
    $region19: #{tpu_custom_call.1} parent=1 // pred_check_branch
      %126 = sbr.rel (0) target = $region21
    $region20: #{tpu_custom_call.1} parent=1 // pred_region
      %s128 = ssub.s32 16, 16
      %129 = vsyncadd [#allocation5], %s128
      %s131 = sshll.u32 [#allocation4], 4
      %s132 = int_to_ptr.vmem [resolvable:$true] %s131
      %134 = dma.vmem_to_hbm [thread:$0]  %s132, 16, %s2, [#allocation5]
    $region21: #{tpu_custom_call.1} parent=1 // pred_fallthru
      _
    // Predicated region
    $region22: #{tpu_custom_call.1} parent=1 // pred_check
      _
    $region23: #{tpu_custom_call.1} parent=1 // pred_check_branch
      %136 = sbr.rel (0) target = $region25
    $region24: #{tpu_custom_call.1} parent=1 // pred_region
      %137 = dma.done [#allocation5], 16
    $region25: #{tpu_custom_call.1} parent=1 // pred_fallthru
      _
    %138 = vsyncpa [#allocation5], 1

</llo_original>
